<compile_context>
chip_gen: v5e
topology: v5e:2x2
jax: 0.10.0
libtpu: 0.0.40
codegen_flags: <defaults>
</compile_context>

<pallas_src>
import functools

import jax
import jax.numpy as jnp
from jax.experimental import pallas as pl
from jax.experimental.pallas import tpu as pltpu


def _kkl_kernel(x_ref, w_ref, o_ref):
    # Single MXU matmul with f32 accumulation:
    #   (TM, fold*(n+p)) @ (fold*(n+p), fold*n) -> (TM, fold*n)
    o_ref[...] = jnp.dot(
        x_ref[...], w_ref[...], preferred_element_type=jnp.float32
    ).astype(o_ref.dtype)


def make_kkl_weight(D, F, fold=4):
    """Precompute the fused, lane-folded weight.

    W_base = [D^T ; F^T] has shape (n+p, n).  The returned weight is the
    fold-way block-diagonal kron(I_fold, W_base) of shape
    (fold*(n+p), fold*n), matching a fold-to-1 batch-row lane fold.
    Call this once at parameter-build time, NOT per forward call.
    """
    W_base = jnp.concatenate([D.T, F.T], axis=0)  # (n+p, n)
    if fold == 1:
        return W_base
    eye = jnp.eye(fold, dtype=W_base.dtype)
    return jnp.kron(eye, W_base)  # (fold*(n+p), fold*n)


def _pick_tile(b_fold):
    """Folded-row tile size: full block for small batches, otherwise >=2
    grid steps of at most 2048 folded rows (sublane-aligned)."""
    if b_fold <= 1024:
        return b_fold  # one block equal to the full array dim (layout-legal)
    half = -(-b_fold // 2)        # cdiv(b_fold, 2): guarantees >= 2 grid steps
    half = -(-half // 8) * 8      # round up to a sublane multiple
    return min(2048, half)


def kkl_optimD_forward(x, W_fold, n, *, fold=4, min_pallas_rows=1024,
                       use_pallas=None):
    """x: (..., n+p); W_fold: from make_kkl_weight(D, F, fold); returns (..., n).

    Equivalent to z @ D^T + yu @ F^T with z = x[..., :n], yu = x[..., n:].
    1-D input is promoted to (1, n+p), matching reshape_pt1 semantics.
    Precision contract: math is done in the dtype promotion of (x, W_fold)
    with f32 MXU accumulation; the output is cast back to x.dtype.
    """
    x = jnp.asarray(x)
    if x.ndim == 1:
        x = x[None, :]
    lead = x.shape[:-1]
    feat = x.shape[-1]          # n + p
    if W_fold.shape != (fold * feat, fold * n):
        raise ValueError(
            f"W_fold shape {W_fold.shape} does not match fold={fold}, "
            f"feat={feat}, n={n}")

    x2 = x.reshape(-1, feat)    # (B, n+p)
    B = x2.shape[0]

    if use_pallas is None:
        use_pallas = B >= min_pallas_rows

    if not use_pallas:
        # Small-batch fast path: a fused XLA dot is strictly faster than a
        # custom-call launch at ~KB problem sizes.
        W_base = W_fold[:feat, :n]
        out = jnp.dot(x2, W_base,
                      preferred_element_type=jnp.float32).astype(x.dtype)
        return out.reshape(lead + (n,))

    # Pad the flattened batch to a multiple of the fold (zero rows produce
    # zero outputs and are dropped below).
    B_pad = -(-B // fold) * fold
    if B_pad != B:
        x2 = jnp.concatenate(
            [x2, jnp.zeros((B_pad - B, feat), x2.dtype)], axis=0)
    B_fold = B_pad // fold
    feat_f = fold * feat        # e.g. 160
    n_f = fold * n              # e.g. 128

    # Zero-copy lane fold: contiguous groups of `fold` rows become one row.
    xf = x2.reshape(B_fold, feat_f)

    TM = _pick_tile(B_fold)
    grid = (pl.cdiv(B_fold, TM),)

    itemsize = jnp.dtype(x.dtype).itemsize
    cost = pl.CostEstimate(
        flops=2 * B_fold * feat_f * n_f,
        transcendentals=0,
        bytes_accessed=(B_fold * feat_f + B_fold * n_f) * itemsize
        + feat_f * n_f * jnp.dtype(W_fold.dtype).itemsize,
    )

    out_f = pl.pallas_call(
        _kkl_kernel,
        out_shape=jax.ShapeDtypeStruct((B_fold, n_f), x.dtype),
        grid=grid,
        in_specs=[
            pl.BlockSpec((TM, feat_f), lambda i: (i, 0)),   # x tile, pipelined
            pl.BlockSpec((feat_f, n_f), lambda i: (0, 0)),  # W resident in VMEM
        ],
        out_specs=pl.BlockSpec((TM, n_f), lambda i: (i, 0)),
        compiler_params=pltpu.CompilerParams(
            dimension_semantics=("parallel",),
            vmem_limit_bytes=32 * 1024 * 1024,
        ),
        cost_estimate=cost,
    )(xf, W_fold)

    out = out_f.reshape(B_pad, n)[:B]
    return out.reshape(lead + (n,))


if __name__ == "__main__":
    key = jax.random.PRNGKey(0)
    k_x, k_d, k_f, k_x3, k_xl = jax.random.split(key, 5)

    n, p, B = 32, 8, 8
    FOLD = 4

    # D: diagonally dominant negative matrix (typical KKL choice), F: dense.
    D = (-jnp.eye(n, dtype=jnp.float32)
         + 0.05 * jax.random.normal(k_d, (n, n), dtype=jnp.float32))
    F = jax.random.normal(k_f, (n, p), dtype=jnp.float32)

    # Fused, lane-folded weight, built once (outside the per-call path).
    W = make_kkl_weight(D, F, fold=FOLD)
    assert W.shape == (FOLD * (n + p), FOLD * n)

    fwd = functools.partial(kkl_optimD_forward, n=n, fold=FOLD)

    # 1) Tiny 2-D input — force the Pallas path to exercise the kernel.
    x = jax.random.normal(k_x, (B, n + p), dtype=jnp.float32)
    out = jax.block_until_ready(fwd(x, W, use_pallas=True))
    ref = x[:, :n] @ D.T + x[:, n:] @ F.T
    assert out.shape == (B, n)
    assert jnp.allclose(out, ref, atol=1e-5, rtol=1e-5)

    # 1b) Same input through the small-batch XLA fast path.
    out_fp = jax.block_until_ready(fwd(x, W))
    assert jnp.allclose(out_fp, ref, atol=1e-5, rtol=1e-5)

    # 2) Higher-rank leading dims with B not a multiple of the fold
    #    (2*3 = 6 rows -> padded to 8) — Pallas path.
    x3 = jax.random.normal(k_x3, (2, 3, n + p), dtype=jnp.float32)
    out3 = jax.block_until_ready(fwd(x3, W, use_pallas=True))
    ref3 = x3[..., :n] @ D.T + x3[..., n:] @ F.T
    assert out3.shape == (2, 3, n)
    assert jnp.allclose(out3, ref3, atol=1e-5, rtol=1e-5)

    # 3) Larger batch exercising the tiled (>1 grid step) parallel path.
    BL = 8192
    xl = jax.random.normal(k_xl, (BL, n + p), dtype=jnp.float32)
    outl = jax.block_until_ready(fwd(xl, W))           # defaults to Pallas
    refl = xl[:, :n] @ D.T + xl[:, n:] @ F.T
    assert outl.shape == (BL, n)
    assert jnp.allclose(outl, refl, atol=1e-4, rtol=1e-4)

    print("KERNEL_OK")
</pallas_src>

<mosaic_0001>
module attributes {stable_mosaic.version = 11 : i64} {
  func.func @_kkl_kernel(%arg0: i32, %arg1: memref<2x160xf32, #tpu.memory_space<vmem>>, %arg2: memref<160x128xf32, #tpu.memory_space<vmem>>, %arg3: memref<2x128xf32, #tpu.memory_space<vmem>>) attributes {dimension_semantics = [#tpu.dimension_semantics<parallel>], iteration_bounds = array<i64: 1>, scalar_prefetch = 0 : i64, scratch_operands = 0 : i64, tpu.core_type = #tpu.core_type<tc>, window_params = [{transform_indices = @transform_0, window_bounds = array<i64: 2, 160>}, {pipeline_mode = #tpu.pipeline_mode<synchronous>, transform_indices = @transform_1, window_bounds = array<i64: 160, 128>}, {transform_indices = @transform_2, window_bounds = array<i64: 2, 128>}]} {
    %c0 = arith.constant 0 : index
    %c0_0 = arith.constant 0 : index
    %0 = vector.load %arg1[%c0, %c0_0] : memref<2x160xf32, #tpu.memory_space<vmem>>, vector<2x160xf32>
    %c0_1 = arith.constant 0 : index
    %c0_2 = arith.constant 0 : index
    %1 = vector.load %arg2[%c0_1, %c0_2] : memref<160x128xf32, #tpu.memory_space<vmem>>, vector<160x128xf32>
    %cst = arith.constant dense<0.000000e+00> : vector<2x128xf32>
    %2 = tpu.matmul %0, %1, %cst {dimension_numbers = #tpu.dot_dimension_numbers<[1], [0], [0], [1], [0, 0, 1, 1], [], []>} : vector<2x160xf32>, vector<160x128xf32>, vector<2x128xf32> -> vector<2x128xf32>
    %c0_3 = arith.constant 0 : index
    %c0_4 = arith.constant 0 : index
    %3 = vector.load %arg3[%c0_3, %c0_4] : memref<2x128xf32, #tpu.memory_space<vmem>>, vector<2x128xf32>
    tpu.vector_store %arg3[%c0_3, %c0_4], %2 {strides = array<i32>} : memref<2x128xf32, #tpu.memory_space<vmem>>, vector<2x128xf32>,
    return
  }
  func.func @transform_0(%arg0: i32) -> (i32, i32) {
    %c0_i32 = arith.constant 0 : i32
    %c0_i32_0 = arith.constant 0 : i32
    return %arg0, %c0_i32 : i32, i32
  }
  func.func @transform_1(%arg0: i32) -> (i32, i32) {
    %c0_i32 = arith.constant 0 : i32
    %c0_i32_0 = arith.constant 0 : i32
    %c0_i32_1 = arith.constant 0 : i32
    return %c0_i32, %c0_i32_0 : i32, i32
  }
  func.func @transform_2(%arg0: i32) -> (i32, i32) {
    %c0_i32 = arith.constant 0 : i32
    %c0_i32_0 = arith.constant 0 : i32
    return %arg0, %c0_i32 : i32, i32
  }
}

</mosaic_0001>

<llo_original>
// kernel: tpu_custom_call.1
$region0: #{tpu_custom_call.1}
  #allocation0 [shape = 'u32[]', space=smem, size = 0x4, offset = 0x4, fixed_abs, tag = 'smem constant byte address 0x4 - core index']
  #allocation1 [shape = 'u32[72,128]{1,0:T(1,128)}', space=vmem, size = 0x9000, scoped, tag = 'internal scratch']
  %s0 = inlined_call_operand.hbm [shape: f32[2,160], index: 0, kind: input, shape index: {}]
  %s1 = inlined_call_operand.hbm [shape: f32[160,128], index: 1, kind: input, shape index: {}]
  %s2 = inlined_call_operand.hbm [shape: f32[2,128], index: 2, kind: output, shape index: {}]
  %s3 = sld [smem:[#allocation0]]
  $region26: #{tpu_custom_call.1} parent=0
    _
  %s5 = ssub.s32 1, %s3
  %s6 = scalar_select 0, %s5, %s3
  $region1: #{tpu_custom_call.1} parent=0
    #allocation2 [shape = 'u8[2048]{0}', space=vmem, size = 0x800, scoped, tag = 'input window, operand 0, single buffered']
    #allocation3 [shape = 's32[1]{0}', space=sflag, size = 0x4, scoped, tag = 'scoped memory for tpu_custom_call.1']
    #allocation4 [shape = 's32[1]{0}', space=sflag, size = 0x4, scoped, tag = 'scoped memory for tpu_custom_call.1']
    #allocation5 [shape = 'u8[81920]{0}', space=vmem, size = 0x14000, scoped, tag = 'input window, operand 1, single buffered']
    #allocation6 [shape = 's32[1]{0}', space=sflag, size = 0x4, scoped, tag = 'scoped memory for tpu_custom_call.1']
    #allocation7 [shape = 'u8[1024]{0}', space=vmem, size = 0x400, scoped, tag = 'output window, operand 0, single buffered']
    %7 = vsyncpa [#allocation3], 0
    %8 = vsyncpa [#allocation6], 0
    %9 = vsyncpa [#allocation4], 0
    // Predicated region
    $region2: #{tpu_custom_call.1} parent=1 // pred_check
      _
    $region3: #{tpu_custom_call.1} parent=1 // pred_check_branch
      %11 = sbr.rel (0) target = $region5
    $region4: #{tpu_custom_call.1} parent=1 // pred_region
      %13 = vsyncadd [#allocation3], 0
      %s15 = sshll.u32 %s0, 4
      %s16 = int_to_ptr.hbm [resolvable:$true] %s15
      %s17 = sshll.u32 [#allocation2], 4
      %s18 = int_to_ptr.vmem [resolvable:$true] %s17
      %20 = dma.hbm_to_vmem [thread:$0]  %s16, 64, %s18, [#allocation3]
    $region5: #{tpu_custom_call.1} parent=1 // pred_fallthru
      _
    // Predicated region
    $region6: #{tpu_custom_call.1} parent=1 // pred_check
      _
    $region7: #{tpu_custom_call.1} parent=1 // pred_check_branch
      %22 = sbr.rel (0) target = $region9
    $region8: #{tpu_custom_call.1} parent=1 // pred_region
      %24 = vsyncadd [#allocation6], 0
      %s25 = sshll.u32 %s1, 4
      %s26 = int_to_ptr.hbm [resolvable:$true] %s25
      %s27 = sshll.u32 [#allocation5], 4
      %s28 = int_to_ptr.vmem [resolvable:$true] %s27
      %33 = dma.hbm_to_vmem [thread:$0]  %s26, 2560, %s28, [#allocation6], 128, 128, 8
    $region9: #{tpu_custom_call.1} parent=1 // pred_fallthru
      _
    // Predicated region
    $region10: #{tpu_custom_call.1} parent=1 // pred_check
      _
    $region11: #{tpu_custom_call.1} parent=1 // pred_check_branch
      %35 = sbr.rel (0) target = $region13
    $region12: #{tpu_custom_call.1} parent=1 // pred_region
      %37 = dma.done [#allocation3], 64
    $region13: #{tpu_custom_call.1} parent=1 // pred_fallthru
      _
    // Predicated region
    $region14: #{tpu_custom_call.1} parent=1 // pred_check
      _
    $region15: #{tpu_custom_call.1} parent=1 // pred_check_branch
      %39 = sbr.rel (0) target = $region17
    $region16: #{tpu_custom_call.1} parent=1 // pred_region
      %41 = dma.done [#allocation6], 2560
    $region17: #{tpu_custom_call.1} parent=1 // pred_fallthru
      _
    %v42 = vld [vmem:[#allocation2] sm:$0xf]
    %v43 = vld [vmem:[#allocation5] sm:$0xff]
    %v44 = vld [vmem:[#allocation5 + $0x8] sm:$0xff]
    %v45 = vld [vmem:[#allocation5 + $0x10] sm:$0xff]
    %v46 = vld [vmem:[#allocation5 + $0x18] sm:$0xff]
    %v47 = vld [vmem:[#allocation5 + $0x20] sm:$0xff]
    %v48 = vld [vmem:[#allocation5 + $0x28] sm:$0xff]
    %v49 = vld [vmem:[#allocation5 + $0x30] sm:$0xff]
    %v50 = vld [vmem:[#allocation5 + $0x38] sm:$0xff]
    %v51 = vld [vmem:[#allocation5 + $0x40] sm:$0xff]
    %v52 = vld [vmem:[#allocation5 + $0x48] sm:$0xff]
    %v53 = vld [vmem:[#allocation5 + $0x50] sm:$0xff]
    %v54 = vld [vmem:[#allocation5 + $0x58] sm:$0xff]
    %v55 = vld [vmem:[#allocation5 + $0x60] sm:$0xff]
    %v56 = vld [vmem:[#allocation5 + $0x68] sm:$0xff]
    %v57 = vld [vmem:[#allocation5 + $0x70] sm:$0xff]
    %v58 = vld [vmem:[#allocation5 + $0x78] sm:$0xff]
    %v59 = vld [vmem:[#allocation5 + $0x80] sm:$0xff]
    %v60 = vld [vmem:[#allocation5 + $0x88] sm:$0xff]
    %v61 = vld [vmem:[#allocation5 + $0x90] sm:$0xff]
    %v62 = vld [vmem:[#allocation5 + $0x98] sm:$0xff]
    %64 = vst [vmem:[#allocation1] ss:$4 sm:$0xff] %v42
    %v65 = vld.sshfl [vmem:[#allocation1] sm:$0xff pattern:$0x73625140]
    %v66 = vld.sshfl [vmem:[#allocation1 + $0x8] sm:$0xff pattern:$0x73625140]
    %vm68 = vcmask 261120
    %v69 = vsel %vm68, %v66, 0
    %71 = vmatpush.msra.mxu0 %v58
    %72 = vmatpush.msra.mxu0 %v57
    %73 = vmatpush.msra.mxu0 %v56
    %74 = vmatpush.msra.mxu0 %v55
    %75 = vmatpush.msra.mxu0 %v54
    %76 = vmatpush.msra.mxu0 %v53
    %77 = vmatpush.msra.mxu0 %v52
    %78 = vmatpush.msra.mxu0 %v51
    %79 = vmatpush.msra.mxu0 %v50
    %80 = vmatpush.msra.mxu0 %v49
    %81 = vmatpush.msra.mxu0 %v48
    %82 = vmatpush.msra.mxu0 %v47
    %83 = vmatpush.msra.mxu0 %v46
    %84 = vmatpush.msra.mxu0 %v45
    %85 = vmatpush.msra.mxu0 %v44
    %86 = vmatpush.msra.mxu0 %v43
    %87 = vmatmul.f32.gmra.mxu0 %v65
    %v88 = vpop.f32.mrf.mxu0
    %v89 = vadd.f32 0.0, %v88
    %90 = vdwg.mxu0
    %91 = vmatpush.msra.mxu0 0.0
    %92 = vmatpush.msra.mxu0 0.0
    %93 = vmatpush.msra.mxu0 0.0
    %94 = vmatpush.msra.mxu0 0.0
    %95 = vmatpush.msra.mxu0 0.0
    %96 = vmatpush.msra.mxu0 0.0
    %97 = vmatpush.msra.mxu0 0.0
    %98 = vmatpush.msra.mxu0 0.0
    %99 = vmatpush.msra.mxu0 0.0
    %100 = vmatpush.msra.mxu0 0.0
    %101 = vmatpush.msra.mxu0 0.0
    %102 = vmatpush.msra.mxu0 0.0
    %103 = vmatpush.msra.mxu0 %v62
    %104 = vmatpush.msra.mxu0 %v61
    %105 = vmatpush.msra.mxu0 %v60
    %106 = vmatpush.msra.mxu0 %v59
    %107 = vmatmul.f32.gmra.mxu0 %v69
    %v108 = vpop.f32.mrf.mxu0
    %v109 = vadd.f32 %v89, %v108
    %110 = vdwg.mxu0
    %111 = vst [vmem:[#allocation7] sm:$0x3] %v109
    // Predicated region
    $region18: #{tpu_custom_call.1} parent=1 // pred_check
      _
    $region19: #{tpu_custom_call.1} parent=1 // pred_check_branch
      %113 = sbr.rel (0) target = $region21
    $region20: #{tpu_custom_call.1} parent=1 // pred_region
      %115 = vsyncadd [#allocation4], 0
      %s117 = sshll.u32 [#allocation7], 4
      %s118 = int_to_ptr.vmem [resolvable:$true] %s117
      %s119 = sshll.u32 %s2, 4
      %s120 = int_to_ptr.hbm [resolvable:$true] %s119
      %122 = dma.vmem_to_hbm [thread:$0]  %s118, 32, %s120, [#allocation4]
    $region21: #{tpu_custom_call.1} parent=1 // pred_fallthru
      _
    // Predicated region
    $region22: #{tpu_custom_call.1} parent=1 // pred_check
      _
    $region23: #{tpu_custom_call.1} parent=1 // pred_check_branch
      %124 = sbr.rel (0) target = $region25
    $region24: #{tpu_custom_call.1} parent=1 // pred_region
      %126 = dma.done [#allocation4], 32
    $region25: #{tpu_custom_call.1} parent=1 // pred_fallthru
      _
    %127 = vsyncpa [#allocation3], 1
    %128 = vsyncpa [#allocation6], 1
    %129 = vsyncpa [#allocation4], 1

</llo_original>
